<compile_context>
chip_gen: v6e
topology: v6e:2x2x1
jax: 0.10.0
libtpu: 0.0.40
codegen_flags: <defaults>
</compile_context>

<pallas_src>
import functools

import jax
import jax.numpy as jnp
import numpy as np
from jax import lax
from jax.experimental import pallas as pl
from jax.experimental.pallas import tpu as pltpu


def _attention_weights_kernel(tcn_ref, tr_ref, wd_tcn_ref, wd_tr_ref, bdiff_ref, out_ref):
    """Per batch tile: d = x_cat . (w_row0 - w_row1) + (b0 - b1);
    out = [sigmoid(d); 1 - sigmoid(d)]  (== softmax over the 2 classes).

    Output block is (2, bm): batch on the lane axis -> lane-dense stores.
    """
    dn = (((1,), (1,)), ((), ()))  # contract the feature axis of both operands (A @ B.T form)
    d = (
        lax.dot_general(wd_tcn_ref[...], tcn_ref[...], dn,
                        preferred_element_type=jnp.float32)
        + lax.dot_general(wd_tr_ref[...], tr_ref[...], dn,
                          preferred_element_type=jnp.float32)
        + bdiff_ref[...]                                   # (1, 1) broadcast over lanes
    )                                                      # (1, bm) f32
    # sigmoid(d) = exp(s0)/(exp(s0)+exp(s1)); stable: exp(-d) overflow -> w0 = 0.
    w0 = 1.0 / (1.0 + jnp.exp(-d))                         # EUP exp, (1, bm) f32
    out_ref[0:1, :] = w0.astype(out_ref.dtype)
    out_ref[1:2, :] = (1.0 - w0).astype(out_ref.dtype)


def _pick_batch_tile(B, block_b):
    """Batch tile: whole batch when tiny, >=2 tiles for v7x megacore, capped at block_b."""
    block_b = max(128, (block_b // 128) * 128)   # lane-dense output needs multiples of 128
    if B < 256:
        return B                                  # single block; too small to split
    if B <= block_b:
        half = -(-B // 2)                         # cdiv(B, 2): >= 2 "parallel" grid steps
        return ((half + 127) // 128) * 128
    return block_b


@functools.partial(jax.jit, static_argnames=("block_b",))
def attention_weights(tcn_feature, transformer_feature, fc_weight, fc_bias, *, block_b=4096):
    """tcn_feature: (B, D_tcn), transformer_feature: (B, D_tr),
    fc_weight: (2, D_tcn + D_tr) [PyTorch nn.Linear layout], fc_bias: (2,).
    Returns softmax attention weights, shape (B, 2), float32."""
    B, Dt = tcn_feature.shape
    Br, Dr = transformer_feature.shape
    assert Br == B

    # Host-side one-time prep: the 2-class softmax only needs the *difference*
    # of the two weight rows, split along the concat axis.
    wd = fc_weight[0, :] - fc_weight[1, :]                          # (Dt + Dr,)
    wd_tcn = wd[:Dt].reshape(1, Dt).astype(tcn_feature.dtype)
    wd_tr = wd[Dt:].reshape(1, Dr).astype(transformer_feature.dtype)
    b_diff = (fc_bias[0] - fc_bias[1]).astype(jnp.float32).reshape(1, 1)

    bm = _pick_batch_tile(B, block_b)
    grid = (pl.cdiv(B, bm),)

    out_t = pl.pallas_call(
        _attention_weights_kernel,
        grid=grid,
        in_specs=[
            pl.BlockSpec((bm, Dt), lambda i: (i, 0)),
            pl.BlockSpec((bm, Dr), lambda i: (i, 0)),
            pl.BlockSpec((1, Dt), lambda i: (0, 0)),
            pl.BlockSpec((1, Dr), lambda i: (0, 0)),
            pl.BlockSpec((1, 1), lambda i: (0, 0)),
        ],
        out_specs=pl.BlockSpec((2, bm), lambda i: (0, i)),
        out_shape=jax.ShapeDtypeStruct((2, B), jnp.float32),
        compiler_params=pltpu.CompilerParams(
            dimension_semantics=("parallel",),
        ),
    )(tcn_feature, transformer_feature, wd_tcn, wd_tr, b_diff)

    # (2, B) lane-dense kernel output -> module's (B, 2) layout (tiny XLA transpose).
    return out_t.T


def _reference(tcn, tr, w, b):
    x = jnp.concatenate([tcn, tr], axis=1)
    s = x @ w.T + b
    return jax.nn.softmax(s, axis=1)


if __name__ == "__main__":
    # Small shapes consistent with the module's forward.
    B, D_TCN, D_TR = 2, 32, 32
    key = jax.random.PRNGKey(0)
    k1, k2, k3, k4 = jax.random.split(key, 4)

    tcn = jax.random.normal(k1, (B, D_TCN), dtype=jnp.float32)
    tr = jax.random.normal(k2, (B, D_TR), dtype=jnp.float32)

    d_in = D_TCN + D_TR
    bound = 1.0 / np.sqrt(d_in)                      # PyTorch nn.Linear default init range
    fc_w = jax.random.uniform(k3, (2, d_in), jnp.float32, -bound, bound)
    fc_b = jax.random.uniform(k4, (2,), jnp.float32, -bound, bound)

    out = attention_weights(tcn, tr, fc_w, fc_b)
    out = jax.block_until_ready(out)

    ref = _reference(tcn, tr, fc_w, fc_b)
    np.testing.assert_allclose(np.asarray(out), np.asarray(ref), rtol=2e-3, atol=2e-3)
    assert out.shape == (B, 2)
    assert np.allclose(np.asarray(out).sum(axis=1), 1.0, atol=1e-5)
    print("KERNEL_OK")
</pallas_src>

<mosaic_0001>
module attributes {stable_mosaic.version = 11 : i64} {
  func.func @_attention_weights_kernel(%arg0: i32, %arg1: memref<2x32xf32, #tpu.memory_space<vmem>>, %arg2: memref<2x32xf32, #tpu.memory_space<vmem>>, %arg3: memref<1x32xf32, #tpu.memory_space<vmem>>, %arg4: memref<1x32xf32, #tpu.memory_space<vmem>>, %arg5: memref<1x1xf32, #tpu.memory_space<vmem>>, %arg6: memref<2x2xf32, #tpu.memory_space<vmem>>) attributes {dimension_semantics = [#tpu.dimension_semantics<parallel>], iteration_bounds = array<i64: 1>, scalar_prefetch = 0 : i64, scratch_operands = 0 : i64, tpu.core_type = #tpu.core_type<tc>, window_params = [{transform_indices = @transform_0, window_bounds = array<i64: 2, 32>}, {transform_indices = @transform_1, window_bounds = array<i64: 2, 32>}, {pipeline_mode = #tpu.pipeline_mode<synchronous>, transform_indices = @transform_2, window_bounds = array<i64: 1, 32>}, {pipeline_mode = #tpu.pipeline_mode<synchronous>, transform_indices = @transform_3, window_bounds = array<i64: 1, 32>}, {pipeline_mode = #tpu.pipeline_mode<synchronous>, transform_indices = @transform_4, window_bounds = array<i64: 1, 1>}, {transform_indices = @transform_5, window_bounds = array<i64: 2, 2>}]} {
    %c0 = arith.constant 0 : index
    %c0_0 = arith.constant 0 : index
    %0 = vector.load %arg3[%c0, %c0_0] : memref<1x32xf32, #tpu.memory_space<vmem>>, vector<1x32xf32>
    %c0_1 = arith.constant 0 : index
    %c0_2 = arith.constant 0 : index
    %1 = vector.load %arg1[%c0_1, %c0_2] : memref<2x32xf32, #tpu.memory_space<vmem>>, vector<2x32xf32>
    %cst = arith.constant dense<0.000000e+00> : vector<1x2xf32>
    %2 = tpu.matmul %0, %1, %cst {dimension_numbers = #tpu.dot_dimension_numbers<[1], [1], [0], [0], [0, 0, 1, 0], [], []>} : vector<1x32xf32>, vector<2x32xf32>, vector<1x2xf32> -> vector<1x2xf32>
    %c0_3 = arith.constant 0 : index
    %c0_4 = arith.constant 0 : index
    %3 = vector.load %arg4[%c0_3, %c0_4] : memref<1x32xf32, #tpu.memory_space<vmem>>, vector<1x32xf32>
    %c0_5 = arith.constant 0 : index
    %c0_6 = arith.constant 0 : index
    %4 = vector.load %arg2[%c0_5, %c0_6] : memref<2x32xf32, #tpu.memory_space<vmem>>, vector<2x32xf32>
    %cst_7 = arith.constant dense<0.000000e+00> : vector<1x2xf32>
    %5 = tpu.matmul %3, %4, %cst_7 {dimension_numbers = #tpu.dot_dimension_numbers<[1], [1], [0], [0], [0, 0, 1, 0], [], []>} : vector<1x32xf32>, vector<2x32xf32>, vector<1x2xf32> -> vector<1x2xf32>
    %6 = arith.addf %2, %5 : vector<1x2xf32>
    %c0_8 = arith.constant 0 : index
    %c0_9 = arith.constant 0 : index
    %7 = vector.load %arg5[%c0_8, %c0_9] : memref<1x1xf32, #tpu.memory_space<vmem>>, vector<1x1xf32>
    %8 = vector.broadcast %7 : vector<1x1xf32> to vector<1x2xf32>
    %9 = arith.addf %6, %8 : vector<1x2xf32>
    %cst_10 = arith.constant 0.000000e+00 : f32
    %10 = vector.broadcast %cst_10 : f32 to vector<1x2xf32>
    %11 = arith.subf %10, %9 : vector<1x2xf32>
    %12 = math.exp %11 : vector<1x2xf32>
    %cst_11 = arith.constant 1.000000e+00 : f32
    %13 = vector.broadcast %cst_11 : f32 to vector<1x2xf32>
    %14 = arith.addf %13, %12 : vector<1x2xf32>
    %cst_12 = arith.constant 1.000000e+00 : f32
    %15 = vector.broadcast %cst_12 : f32 to vector<1x2xf32>
    %16 = arith.divf %15, %14 : vector<1x2xf32>
    %c0_13 = arith.constant 0 : index
    %c0_14 = arith.constant 0 : index
    %17 = vector.load %arg6[%c0_13, %c0_14] : memref<2x2xf32, #tpu.memory_space<vmem>>, vector<1x2xf32>
    tpu.vector_store %arg6[%c0_13, %c0_14], %16 {strides = array<i32>} : memref<2x2xf32, #tpu.memory_space<vmem>>, vector<1x2xf32>,
    %cst_15 = arith.constant 1.000000e+00 : f32
    %18 = vector.broadcast %cst_15 : f32 to vector<1x2xf32>
    %19 = arith.subf %18, %16 : vector<1x2xf32>
    %c1 = arith.constant 1 : index
    %c0_16 = arith.constant 0 : index
    %20 = vector.load %arg6[%c1, %c0_16] : memref<2x2xf32, #tpu.memory_space<vmem>>, vector<1x2xf32>
    tpu.vector_store %arg6[%c1, %c0_16], %19 {strides = array<i32>} : memref<2x2xf32, #tpu.memory_space<vmem>>, vector<1x2xf32>,
    return
  }
  func.func @transform_0(%arg0: i32) -> (i32, i32) {
    %c0_i32 = arith.constant 0 : i32
    %c0_i32_0 = arith.constant 0 : i32
    return %arg0, %c0_i32 : i32, i32
  }
  func.func @transform_1(%arg0: i32) -> (i32, i32) {
    %c0_i32 = arith.constant 0 : i32
    %c0_i32_0 = arith.constant 0 : i32
    return %arg0, %c0_i32 : i32, i32
  }
  func.func @transform_2(%arg0: i32) -> (i32, i32) {
    %c0_i32 = arith.constant 0 : i32
    %c0_i32_0 = arith.constant 0 : i32
    %c0_i32_1 = arith.constant 0 : i32
    return %c0_i32, %c0_i32_0 : i32, i32
  }
  func.func @transform_3(%arg0: i32) -> (i32, i32) {
    %c0_i32 = arith.constant 0 : i32
    %c0_i32_0 = arith.constant 0 : i32
    %c0_i32_1 = arith.constant 0 : i32
    return %c0_i32, %c0_i32_0 : i32, i32
  }
  func.func @transform_4(%arg0: i32) -> (i32, i32) {
    %c0_i32 = arith.constant 0 : i32
    %c0_i32_0 = arith.constant 0 : i32
    %c0_i32_1 = arith.constant 0 : i32
    return %c0_i32, %c0_i32_0 : i32, i32
  }
  func.func @transform_5(%arg0: i32) -> (i32, i32) {
    %c0_i32 = arith.constant 0 : i32
    %c0_i32_0 = arith.constant 0 : i32
    return %c0_i32, %arg0 : i32, i32
  }
}

</mosaic_0001>

<llo_original>
// kernel: attention_weights.1
$region0: #{attention_weights.1}
  #allocation0 [shape = 'u32[]', space=smem, size = 0x4, offset = 0x4, fixed_abs, tag = 'smem constant byte address 0x4 - core index']
  #allocation1 [shape = 'u32[144,128]{1,0:T(1,128)}', space=vmem, size = 0x12000, scoped, tag = 'internal scratch']
  #allocation2 [shape = 'f32[1,1]{1,0:T(1,128)S(1)}', space=vmem, size = 0x200, scoped, tag = 'scoped memory for attention_weights.1']
  %s0 = inlined_call_operand.vmem [shape: f32[2,32], index: 0, kind: input, shape index: {}]
  %s1 = inlined_call_operand.vmem [shape: f32[2,32], index: 1, kind: input, shape index: {}]
  %s2 = inlined_call_operand.vmem [shape: f32[1,32], index: 2, kind: input, shape index: {}]
  %s3 = inlined_call_operand.vmem [shape: f32[1,32], index: 3, kind: input, shape index: {}]
  %s4 = inlined_call_operand.<no memory space> [shape: f32[1,1], index: 4, kind: input, shape index: {}]
  %s5 = inlined_call_operand.vmem [shape: f32[2,2], index: 5, kind: output, shape index: {}]
  %s6 = sld [smem:[#allocation0]]
  $region30: #{attention_weights.1} parent=0
    _
  %s8 = ssub.s32 1, %s6
  %s9 = scalar_select 0, %s8, %s6
  %v10 = vstv %s4
  %11 = vst [vmem:[#allocation2] sm:$0x1] %v10
  // Predicated region
  $region2: #{attention_weights.1} parent=0 // pred_check
    _
  $region3: #{attention_weights.1} parent=0 // pred_check_branch
    %13 = sbr.rel (0) target = $region5
  $region4: #{attention_weights.1} parent=0 // pred_region
    _
  $region5: #{attention_weights.1} parent=0 // pred_fallthru
    _
  // Predicated region
  $region6: #{attention_weights.1} parent=0 // pred_check
    _
  $region7: #{attention_weights.1} parent=0 // pred_check_branch
    %15 = sbr.rel (0) target = $region9
  $region8: #{attention_weights.1} parent=0 // pred_region
    _
  $region9: #{attention_weights.1} parent=0 // pred_fallthru
    _
  // Predicated region
  $region10: #{attention_weights.1} parent=0 // pred_check
    _
  $region11: #{attention_weights.1} parent=0 // pred_check_branch
    %17 = sbr.rel (0) target = $region13
  $region12: #{attention_weights.1} parent=0 // pred_region
    _
  $region13: #{attention_weights.1} parent=0 // pred_fallthru
    _
  // Predicated region
  $region14: #{attention_weights.1} parent=0 // pred_check
    _
  $region15: #{attention_weights.1} parent=0 // pred_check_branch
    %19 = sbr.rel (0) target = $region17
  $region16: #{attention_weights.1} parent=0 // pred_region
    _
  $region17: #{attention_weights.1} parent=0 // pred_fallthru
    _
  // Predicated region
  $region18: #{attention_weights.1} parent=0 // pred_check
    _
  $region19: #{attention_weights.1} parent=0 // pred_check_branch
    %21 = sbr.rel (0) target = $region21
  $region20: #{attention_weights.1} parent=0 // pred_region
    _
  $region21: #{attention_weights.1} parent=0 // pred_fallthru
    _
  %v22 = vld [vmem:[%s2] sm:$0x1]
  %v23 = vld [vmem:[%s0] sm:$0x3]
  %v24 = vld [vmem:[%s3] sm:$0x1]
  %v25 = vld [vmem:[%s1] sm:$0x3]
  %vm26 = vcmask 261120
  %v28 = vsel %vm26, %v24, 0
  %v31 = vsel %vm26, %v25, 0
  %33 = vmatprep.subr.mxu0 0.0
  %34 = vmatpush1.xpose.msra.mxu0 0.0
  %35 = vmatprep.subr.mxu0 0.0
  %36 = vmatpush1.xpose.msra.mxu0 0.0
  %37 = vmatprep.subr.mxu0 0.0
  %38 = vmatpush1.xpose.msra.mxu0 0.0
  %39 = vmatprep.subr.mxu0 0.0
  %40 = vmatpush1.xpose.msra.mxu0 0.0
  %41 = vmatprep.subr.mxu0 0.0
  %42 = vmatpush1.xpose.msra.mxu0 0.0
  %43 = vmatprep.subr.mxu0 0.0
  %44 = vmatpush1.xpose.msra.mxu0 0.0
  %45 = vmatprep.subr.mxu0 0.0
  %46 = vmatpush1.xpose.msra.mxu0 0.0
  %47 = vmatprep.subr.mxu0 0.0
  %48 = vmatpush1.xpose.msra.mxu0 0.0
  %49 = vmatprep.subr.mxu0 0.0
  %50 = vmatpush1.xpose.msra.mxu0 0.0
  %51 = vmatprep.subr.mxu0 0.0
  %52 = vmatpush1.xpose.msra.mxu0 0.0
  %53 = vmatprep.subr.mxu0 0.0
  %54 = vmatpush1.xpose.msra.mxu0 0.0
  %55 = vmatprep.subr.mxu0 0.0
  %56 = vmatpush1.xpose.msra.mxu0 0.0
  %57 = vmatprep.subr.mxu0 0.0
  %58 = vmatpush1.xpose.msra.mxu0 0.0
  %59 = vmatprep.subr.mxu0 0.0
  %60 = vmatpush1.xpose.msra.mxu0 0.0
  %61 = vmatprep.subr.mxu0 0.0
  %62 = vmatpush1.xpose.msra.mxu0 0.0
  %63 = vmatprep.subr.mxu0 0.0
  %64 = vmatpush1.xpose.msra.mxu0 %v31
  %65 = vmatprep.subr.mxu0 0.0
  %66 = vmatpush2.xpose.msra.mxu0 0.0
  %67 = vmatprep.subr.mxu0 0.0
  %68 = vmatpush2.xpose.msra.mxu0 0.0
  %69 = vmatprep.subr.mxu0 0.0
  %70 = vmatpush2.xpose.msra.mxu0 0.0
  %71 = vmatprep.subr.mxu0 0.0
  %72 = vmatpush2.xpose.msra.mxu0 0.0
  %73 = vmatprep.subr.mxu0 0.0
  %74 = vmatpush2.xpose.msra.mxu0 0.0
  %75 = vmatprep.subr.mxu0 0.0
  %76 = vmatpush2.xpose.msra.mxu0 0.0
  %77 = vmatprep.subr.mxu0 0.0
  %78 = vmatpush2.xpose.msra.mxu0 0.0
  %79 = vmatprep.subr.mxu0 0.0
  %80 = vmatpush2.xpose.msra.mxu0 0.0
  %81 = vmatprep.subr.mxu0 0.0
  %82 = vmatpush2.xpose.msra.mxu0 0.0
  %83 = vmatprep.subr.mxu0 0.0
  %84 = vmatpush2.xpose.msra.mxu0 0.0
  %85 = vmatprep.subr.mxu0 0.0
  %86 = vmatpush2.xpose.msra.mxu0 0.0
  %87 = vmatprep.subr.mxu0 0.0
  %88 = vmatpush2.xpose.msra.mxu0 0.0
  %89 = vmatprep.subr.mxu0 0.0
  %90 = vmatpush2.xpose.msra.mxu0 0.0
  %91 = vmatprep.subr.mxu0 0.0
  %92 = vmatpush2.xpose.msra.mxu0 0.0
  %93 = vmatprep.subr.mxu0 0.0
  %94 = vmatpush2.xpose.msra.mxu0 0.0
  %95 = vmatprep.subr.mxu0 0.0
  %96 = vmatpush2.xpose.msra.mxu0 0.0
  %97 = vmatprep.mubr.f32.mxu0 0.0
  %98 = vmatmul.mubr.f32.gmra.mxu0 %v28
  %v99 = vpop.f32.mrf.mxu0
  %v100 = vadd.f32 0.0, %v99
  %v101 = vpop.f32.mrf.mxu0
  %102 = vdwg.mxu0
  %v104 = vsel %vm26, %v22, 0
  %v107 = vsel %vm26, %v23, 0
  %109 = vmatprep.subr.mxu0 0.0
  %110 = vmatpush1.xpose.msra.mxu0 0.0
  %111 = vmatprep.subr.mxu0 0.0
  %112 = vmatpush1.xpose.msra.mxu0 0.0
  %113 = vmatprep.subr.mxu0 0.0
  %114 = vmatpush1.xpose.msra.mxu0 0.0
  %115 = vmatprep.subr.mxu0 0.0
  %116 = vmatpush1.xpose.msra.mxu0 0.0
  %117 = vmatprep.subr.mxu0 0.0
  %118 = vmatpush1.xpose.msra.mxu0 0.0
  %119 = vmatprep.subr.mxu0 0.0
  %120 = vmatpush1.xpose.msra.mxu0 0.0
  %121 = vmatprep.subr.mxu0 0.0
  %122 = vmatpush1.xpose.msra.mxu0 0.0
  %123 = vmatprep.subr.mxu0 0.0
  %124 = vmatpush1.xpose.msra.mxu0 0.0
  %125 = vmatprep.subr.mxu0 0.0
  %126 = vmatpush1.xpose.msra.mxu0 0.0
  %127 = vmatprep.subr.mxu0 0.0
  %128 = vmatpush1.xpose.msra.mxu0 0.0
  %129 = vmatprep.subr.mxu0 0.0
  %130 = vmatpush1.xpose.msra.mxu0 0.0
  %131 = vmatprep.subr.mxu0 0.0
  %132 = vmatpush1.xpose.msra.mxu0 0.0
  %133 = vmatprep.subr.mxu0 0.0
  %134 = vmatpush1.xpose.msra.mxu0 0.0
  %135 = vmatprep.subr.mxu0 0.0
  %136 = vmatpush1.xpose.msra.mxu0 0.0
  %137 = vmatprep.subr.mxu0 0.0
  %138 = vmatpush1.xpose.msra.mxu0 0.0
  %139 = vmatprep.subr.mxu0 0.0
  %140 = vmatpush1.xpose.msra.mxu0 %v107
  %141 = vmatprep.subr.mxu0 0.0
  %142 = vmatpush2.xpose.msra.mxu0 0.0
  %143 = vmatprep.subr.mxu0 0.0
  %144 = vmatpush2.xpose.msra.mxu0 0.0
  %145 = vmatprep.subr.mxu0 0.0
  %146 = vmatpush2.xpose.msra.mxu0 0.0
  %147 = vmatprep.subr.mxu0 0.0
  %148 = vmatpush2.xpose.msra.mxu0 0.0
  %149 = vmatprep.subr.mxu0 0.0
  %150 = vmatpush2.xpose.msra.mxu0 0.0
  %151 = vmatprep.subr.mxu0 0.0
  %152 = vmatpush2.xpose.msra.mxu0 0.0
  %153 = vmatprep.subr.mxu0 0.0
  %154 = vmatpush2.xpose.msra.mxu0 0.0
  %155 = vmatprep.subr.mxu0 0.0
  %156 = vmatpush2.xpose.msra.mxu0 0.0
  %157 = vmatprep.subr.mxu0 0.0
  %158 = vmatpush2.xpose.msra.mxu0 0.0
  %159 = vmatprep.subr.mxu0 0.0
  %160 = vmatpush2.xpose.msra.mxu0 0.0
  %161 = vmatprep.subr.mxu0 0.0
  %162 = vmatpush2.xpose.msra.mxu0 0.0
  %163 = vmatprep.subr.mxu0 0.0
  %164 = vmatpush2.xpose.msra.mxu0 0.0
  %165 = vmatprep.subr.mxu0 0.0
  %166 = vmatpush2.xpose.msra.mxu0 0.0
  %167 = vmatprep.subr.mxu0 0.0
  %168 = vmatpush2.xpose.msra.mxu0 0.0
  %169 = vmatprep.subr.mxu0 0.0
  %170 = vmatpush2.xpose.msra.mxu0 0.0
  %171 = vmatprep.subr.mxu0 0.0
  %172 = vmatpush2.xpose.msra.mxu0 0.0
  %173 = vmatprep.mubr.f32.mxu0 0.0
  %174 = vmatmul.mubr.f32.gmra.mxu0 %v104
  %v175 = vpop.f32.mrf.mxu0
  %v176 = vadd.f32 %v100, %v175
  %v177 = vpop.f32.mrf.mxu0
  %178 = vdwg.mxu0
  %v179 = vld [vmem:[#allocation2] sm:$0x1]
  %181 = vset.pattern.permute.xlu0 0
  %182 = vperm.xlu0 %181, %v179
  %v183 = vpop.permute.xlu0 %182
  %v185 = vlaneseq
  %v186 = vshrl.u32 %v185, 7
  %v187 = vsub.s32 0, %v186
  %v188 = vrot.slane %v183, %v187
  %v189 = vadd.f32 %v176, %v188
  %v190 = vsub.f32 0.0, %v189
  %v191 = vmul.f32 %v190, 1.442695
  %v192 = vpow.pop %v191
  %v193 = vadd.f32 %v192, 1.0
  %v194 = vrcp.pop %v193
  %v195 = vmul.f32 1.0, %v194
  %vm196 = vcmask 8192
  %197 = vst.msk [vmem:[%s5] sm:$0x1] %vm196, %v195
  %v198 = vsub.f32 1.0, %v195
  %199 = vst.msk [vmem:[%s5 + $0x1] sm:$0x1] %vm196, %v198
  // Predicated region
  $region22: #{attention_weights.1} parent=0 // pred_check
    _
  $region23: #{attention_weights.1} parent=0 // pred_check_branch
    %201 = sbr.rel (0) target = $region25
  $region24: #{attention_weights.1} parent=0 // pred_region
    _
  $region25: #{attention_weights.1} parent=0 // pred_fallthru
    _
  // Predicated region
  $region26: #{attention_weights.1} parent=0 // pred_check
    _
  $region27: #{attention_weights.1} parent=0 // pred_check_branch
    %203 = sbr.rel (0) target = $region29
  $region28: #{attention_weights.1} parent=0 // pred_region
    _
  $region29: #{attention_weights.1} parent=0 // pred_fallthru
    _

</llo_original>
